<compile_context>
chip_gen: v7x
topology: tpu7x:2x2x1
jax: 0.10.0
libtpu: 0.0.40
codegen_flags: <defaults>
</compile_context>

<pallas_src>
import math
from functools import partial

import jax
import jax.numpy as jnp
from jax import lax
from jax.experimental import pallas as pl
from jax.experimental.pallas import tpu as pltpu


# ----------------------------------------------------------------------------
# helpers
# ----------------------------------------------------------------------------
def _round_up(x, m):
    return ((x + m - 1) // m) * m


def _row_tile(rows, max_tile=256):
    """Pick a sublane-aligned row tile and the padded row count."""
    t = min(max_tile, _round_up(rows, 8))
    return t, _round_up(rows, t)


def _full(a):
    """BlockSpec covering the whole array (constant / weight inputs)."""
    zeros = (0,) * a.ndim
    return pl.BlockSpec(a.shape, lambda *args: zeros)


_SQRT_2_OVER_PI = math.sqrt(2.0 / math.pi)


def _gelu_tanh(x):
    # tanh-approx GELU (EUP tanh).  torch nn.GELU() uses exact erf; max abs
    # deviation is ~1e-3 — swap in an erf polynomial if bit-faithfulness is needed.
    return 0.5 * x * (1.0 + jnp.tanh(_SQRT_2_OVER_PI * (x + 0.044715 * x * x * x)))


# ----------------------------------------------------------------------------
# Kernel 1: row-tiled matmul + bias    out = a @ b + bias
# ----------------------------------------------------------------------------
def _matmul_bias_kernel(a_ref, b_ref, bias_ref, o_ref):
    o_ref[...] = (jnp.dot(a_ref[...], b_ref[...], preferred_element_type=jnp.float32)
                  + bias_ref[...])


def matmul_bias(a, b, bias, max_tile=256):
    M, K = a.shape
    K2, N = b.shape
    assert K == K2
    tm, Mp = _row_tile(M, max_tile)
    if Mp != M:
        a = jnp.pad(a, ((0, Mp - M), (0, 0)))
    out = pl.pallas_call(
        _matmul_bias_kernel,
        out_shape=jax.ShapeDtypeStruct((Mp, N), jnp.float32),
        grid=(Mp // tm,),
        in_specs=[pl.BlockSpec((tm, K), lambda i: (i, 0)),
                  pl.BlockSpec((K, N), lambda i: (0, 0)),
                  pl.BlockSpec((1, N), lambda i: (0, 0))],
        out_specs=pl.BlockSpec((tm, N), lambda i: (i, 0)),
        compiler_params=pltpu.CompilerParams(dimension_semantics=("parallel",)),
    )(a, b, bias.reshape(1, N))
    return out[:M]


# ----------------------------------------------------------------------------
# Kernel 2: SAT fusion (ScaledDotProductAttention over the 3 tokens
#           [patch_token, elevation_embed, sift_embed] per patch; the three
#           output chunks are summed -> new patch token).  Row-tiled over all
#           B*num_patches rows; per-head math done with block-diag matmuls.
# ----------------------------------------------------------------------------
def _sat_kernel(tok_ref, ele_ref, sift_ref,
                wq_ref, bq_ref, wk_ref, bk_ref, wv_ref, bv_ref, wo_ref, bo_ref,
                red_ref, exp_ref, o_ref, *, scale):
    wq, wk, wv, wo = wq_ref[...], wk_ref[...], wv_ref[...], wo_ref[...]
    bq, bk, bv, bo = bq_ref[...], bk_ref[...], bv_ref[...], bo_ref[...]
    red = red_ref[...]            # (h*d_k, h)  block-diag ones: per-head reduce
    expd = exp_ref[...]           # (h, h*d_v)  block-diag ones: per-head expand

    xs = (tok_ref[...], ele_ref[...], sift_ref[...])      # each (TM, D)
    q = [jnp.dot(z, wq, preferred_element_type=jnp.float32) + bq for z in xs]
    k = [jnp.dot(z, wk, preferred_element_type=jnp.float32) + bk for z in xs]
    v = [jnp.dot(z, wv, preferred_element_type=jnp.float32) + bv for z in xs]

    # per-(row, head) scores for all 9 (query i, key j) pairs  -> (TM, h)
    s = [[jnp.dot(q[i] * k[j], red, preferred_element_type=jnp.float32) * scale
          for j in range(3)] for i in range(3)]

    # softmax over the 3 keys per (row, head, query); accumulate key-weight sums
    wsum = [jnp.zeros_like(s[0][0]) for _ in range(3)]    # Σ_i softmax_ij, (TM, h)
    for i in range(3):
        m = jnp.maximum(jnp.maximum(s[i][0], s[i][1]), s[i][2])
        e = [jnp.exp(s[i][j] - m) for j in range(3)]
        inv = pl.reciprocal(e[0] + e[1] + e[2], approx=True)
        for j in range(3):
            wsum[j] = wsum[j] + e[j] * inv

    # pre-activation (heads contiguous): Σ_j expand(wsum_j) ⊙ v_j   -> (TM, h*d_v)
    pre = sum(jnp.dot(wsum[j], expd, preferred_element_type=jnp.float32) * v[j]
              for j in range(3))
    # three fc_o outputs summed  ==  (Σ pre-activations) @ Wo + 3*bias
    o_ref[...] = jnp.dot(pre, wo, preferred_element_type=jnp.float32) + 3.0 * bo


def sat_fuse(xpe, ele_em, sift_em, sp, h, d_k, d_v, max_tile=256):
    B, NP, D = xpe.shape
    rows = B * NP
    tm, rows_pad = _row_tile(rows, max_tile)

    tok = xpe.reshape(rows, D)
    ele = jnp.repeat(ele_em, NP, axis=0)       # per-row elevation embedding
    sif = jnp.repeat(sift_em, NP, axis=0)      # per-row SIFT embedding
    if rows_pad != rows:
        pad = ((0, rows_pad - rows), (0, 0))
        tok, ele, sif = jnp.pad(tok, pad), jnp.pad(ele, pad), jnp.pad(sif, pad)

    red = jnp.kron(jnp.eye(h, dtype=jnp.float32), jnp.ones((d_k, 1), jnp.float32))
    expd = jnp.kron(jnp.eye(h, dtype=jnp.float32), jnp.ones((1, d_v), jnp.float32))

    kernel = partial(_sat_kernel, scale=1.0 / math.sqrt(d_k))
    row_spec = pl.BlockSpec((tm, D), lambda r: (r, 0))
    out = pl.pallas_call(
        kernel,
        out_shape=jax.ShapeDtypeStruct((rows_pad, D), jnp.float32),
        grid=(rows_pad // tm,),
        in_specs=[row_spec, row_spec, row_spec,
                  _full(sp['wq']), _full(sp['bq']),
                  _full(sp['wk']), _full(sp['bk']),
                  _full(sp['wv']), _full(sp['bv']),
                  _full(sp['wo']), _full(sp['bo']),
                  _full(red), _full(expd)],
        out_specs=pl.BlockSpec((tm, D), lambda r: (r, 0)),
        compiler_params=pltpu.CompilerParams(dimension_semantics=("parallel",)),
    )(tok, ele, sif, sp['wq'], sp['bq'], sp['wk'], sp['bk'],
      sp['wv'], sp['bv'], sp['wo'], sp['bo'], red, expd)
    return out[:rows].reshape(B, NP, D)


# ----------------------------------------------------------------------------
# Kernel 3: one full ViT block (LN1 -> MHSA -> +res -> LN2 -> MLP(GELU) -> +res)
#           TB images per grid step; sequence padded to Npad (keys masked).
# ----------------------------------------------------------------------------
def _vit_block_kernel(x_ref, g1_ref, be1_ref, wq_ref, wk_ref, wv_ref,
                      wproj_ref, bproj_ref, g2_ref, be2_ref,
                      w1_ref, b1_ref, w2_ref, b2_ref, o_ref,
                      *, num_heads, seq_len, eps):
    x = x_ref[...]                                  # (TB, Npad, D)
    TB, Npad, D = x.shape
    hd = D // num_heads
    scale = hd ** -0.5
    xf = x.reshape(TB * Npad, D)

    def ln(z, g, b):
        mu = jnp.mean(z, axis=-1, keepdims=True)
        d = z - mu
        var = jnp.mean(d * d, axis=-1, keepdims=True)
        return d * lax.rsqrt(var + eps) * g + b

    # --- attention ---
    xn = ln(xf, g1_ref[...], be1_ref[...])
    q = (jnp.dot(xn, wq_ref[...], preferred_element_type=jnp.float32) * scale
         ).reshape(TB, Npad, D)
    k = jnp.dot(xn, wk_ref[...], preferred_element_type=jnp.float32).reshape(TB, Npad, D)
    v = jnp.dot(xn, wv_ref[...], preferred_element_type=jnp.float32).reshape(TB, Npad, D)

    key_ok = lax.broadcasted_iota(jnp.int32, (1, 1, Npad), 2) < seq_len
    col = lax.broadcasted_iota(jnp.int32, (1, 1, D), 2)

    # per-head scores/outputs via constant column masks (full-width ops, no
    # narrow slices, no concatenate; summed contributions reconstruct concat).
    ao = jnp.zeros((TB, Npad, D), jnp.float32)
    for hh in range(num_heads):
        sel = ((col >= hh * hd) & (col < (hh + 1) * hd)).astype(jnp.float32)
        s = jnp.einsum('bqd,bkd->bqk', q * sel, k,
                       preferred_element_type=jnp.float32)          # (TB, Npad, Npad)
        s = jnp.where(key_ok, s, jnp.float32(-1e30))                 # mask padded keys
        p = jnp.exp(s - jnp.max(s, axis=-1, keepdims=True))
        p = p * pl.reciprocal(jnp.sum(p, axis=-1, keepdims=True), approx=True)
        ao = ao + jnp.einsum('bqk,bkd->bqd', p, v * sel,
                             preferred_element_type=jnp.float32)

    xf = xf + (jnp.dot(ao.reshape(TB * Npad, D), wproj_ref[...],
                       preferred_element_type=jnp.float32) + bproj_ref[...])

    # --- MLP ---
    xn2 = ln(xf, g2_ref[...], be2_ref[...])
    h1 = jnp.dot(xn2, w1_ref[...], preferred_element_type=jnp.float32) + b1_ref[...]
    h1 = _gelu_tanh(h1)
    xf = xf + jnp.dot(h1, w2_ref[...], preferred_element_type=jnp.float32) + b2_ref[...]
    o_ref[...] = xf.reshape(TB, Npad, D)


def vit_block(x, bp, num_heads, seq_len, tb, eps=1e-5):
    Bp, Npad, D = x.shape
    kernel = partial(_vit_block_kernel, num_heads=num_heads, seq_len=seq_len, eps=eps)
    xin = pl.BlockSpec((tb, Npad, D), lambda b: (b, 0, 0))
    return pl.pallas_call(
        kernel,
        out_shape=jax.ShapeDtypeStruct((Bp, Npad, D), jnp.float32),
        grid=(Bp // tb,),
        in_specs=[xin,
                  _full(bp['g1']), _full(bp['be1']),
                  _full(bp['wq']), _full(bp['wk']), _full(bp['wv']),
                  _full(bp['wproj']), _full(bp['bproj']),
                  _full(bp['g2']), _full(bp['be2']),
                  _full(bp['w1']), _full(bp['b1']),
                  _full(bp['w2']), _full(bp['b2'])],
        out_specs=pl.BlockSpec((tb, Npad, D), lambda b: (b, 0, 0)),
        compiler_params=pltpu.CompilerParams(dimension_semantics=("parallel",)),
    )(x, bp['g1'], bp['be1'], bp['wq'], bp['wk'], bp['wv'],
      bp['wproj'], bp['bproj'], bp['g2'], bp['be2'],
      bp['w1'], bp['b1'], bp['w2'], bp['b2'])


# ----------------------------------------------------------------------------
# Kernel 4: final LayerNorm (applied to the CLS rows only)
# ----------------------------------------------------------------------------
def _ln_rows_kernel(x_ref, g_ref, b_ref, o_ref, *, eps):
    x = x_ref[...]
    mu = jnp.mean(x, axis=-1, keepdims=True)
    d = x - mu
    var = jnp.mean(d * d, axis=-1, keepdims=True)
    o_ref[...] = d * lax.rsqrt(var + eps) * g_ref[...] + b_ref[...]


def layernorm_rows(x, g, b, eps=1e-5, max_tile=256):
    M, D = x.shape
    tm, Mp = _row_tile(M, max_tile)
    if Mp != M:
        x = jnp.pad(x, ((0, Mp - M), (0, 0)))
    out = pl.pallas_call(
        partial(_ln_rows_kernel, eps=eps),
        out_shape=jax.ShapeDtypeStruct((Mp, D), jnp.float32),
        grid=(Mp // tm,),
        in_specs=[pl.BlockSpec((tm, D), lambda i: (i, 0)),
                  pl.BlockSpec((1, D), lambda i: (0, 0)),
                  pl.BlockSpec((1, D), lambda i: (0, 0))],
        out_specs=pl.BlockSpec((tm, D), lambda i: (i, 0)),
        compiler_params=pltpu.CompilerParams(dimension_semantics=("parallel",)),
    )(x, g, b)
    return out[:M]


# ----------------------------------------------------------------------------
# glue: PatchEmbed (conv k=s=P  ==  im2col + tiled matmul)
# ----------------------------------------------------------------------------
def patch_embed(x, w, b, patch_size):
    B, C, H, W = x.shape
    P = patch_size
    H0, W0 = H // P, W // P
    patches = x.reshape(B, C, H0, P, W0, P)
    patches = patches.transpose(0, 2, 4, 1, 3, 5)        # (B, H0, W0, C, P, P)
    patches = patches.reshape(B * H0 * W0, C * P * P)
    wf = w.reshape(w.shape[0], -1).T                     # (C*P*P, D)
    out = matmul_bias(patches, wf, b)                    # (B*NP, D)  -- Pallas
    return out.reshape(B, H0 * W0, -1)


# ----------------------------------------------------------------------------
# parameters (deterministic synthetic init, mirrors __init__ shapes)
# ----------------------------------------------------------------------------
def init_params(key, *, embed_dim, in_chans, patch_size, num_patches, depth,
                num_heads, mlp_ratio, num_ele_slice, voc_k, sat_h, sat_dk, sat_dv):
    D = embed_dim
    keys = iter(jax.random.split(key, 9 + 6 * depth))

    def nrm(shape, std=0.02):
        return (std * jax.random.normal(next(keys), shape)).astype(jnp.float32)

    mlp_hidden = int(D * mlp_ratio)
    params = dict(
        cls_token=nrm((1, 1, D)),
        pos_embed=nrm((1, num_patches + 1, D)),
        eleva_embed=nrm((num_ele_slice, D)),
        sift_embed=nrm((voc_k, D)),
        patch_w=nrm((D, in_chans, patch_size, patch_size)),   # conv weight (D,C,P,P)
        patch_b=jnp.zeros((D,), jnp.float32),
        sat=dict(                                              # Linear weights as (in, out)
            wq=nrm((D, sat_h * sat_dk)), bq=jnp.zeros((1, sat_h * sat_dk), jnp.float32),
            wk=nrm((D, sat_h * sat_dk)), bk=jnp.zeros((1, sat_h * sat_dk), jnp.float32),
            wv=nrm((D, sat_h * sat_dv)), bv=jnp.zeros((1, sat_h * sat_dv), jnp.float32),
            wo=nrm((sat_h * sat_dv, D)), bo=jnp.zeros((1, D), jnp.float32),
        ),
        blocks=[],
        norm_g=jnp.ones((1, D), jnp.float32),
        norm_b=jnp.zeros((1, D), jnp.float32),
    )
    for _ in range(depth):
        params['blocks'].append(dict(
            g1=jnp.ones((1, D), jnp.float32), be1=jnp.zeros((1, D), jnp.float32),
            wq=nrm((D, D)), wk=nrm((D, D)), wv=nrm((D, D)),     # qkv_bias=False (default)
            wproj=nrm((D, D)), bproj=jnp.zeros((1, D), jnp.float32),
            g2=jnp.ones((1, D), jnp.float32), be2=jnp.zeros((1, D), jnp.float32),
            w1=nrm((D, mlp_hidden)), b1=jnp.zeros((1, mlp_hidden), jnp.float32),
            w2=nrm((mlp_hidden, D)), b2=jnp.zeros((1, D), jnp.float32),
        ))
    return params


# ----------------------------------------------------------------------------
# forward (== SelfAttention_Feature_Embedding_Encoder.forward, eval mode)
# ----------------------------------------------------------------------------
def forward(params, x, x_g_norm, sift_bof, per_li, cfg):
    B, C, H, W = x.shape
    D = cfg['embed_dim']

    # 1) SIFT BoF embedding.
    # TODO(synk): cv2.SIFT_create + scipy vq (detectAndCompute_onePic / siftAndBoF_onePic)
    #             has no Pallas/JAX equivalent; `sift_bof` is a precomputed synthetic histogram.
    ssum = sift_bof.sum(axis=1, keepdims=True)
    sift_li = sift_bof / ssum
    sift_li = jnp.where(jnp.isnan(sift_li), jnp.zeros_like(sift_li), sift_li)
    sift_em = matmul_bias(sift_li, params['sift_embed'], jnp.zeros((D,), jnp.float32))  # (Bg, D)

    # 2) patch embedding (Pallas, row-tiled matmul)
    xpe = patch_embed(x, params['patch_w'], params['patch_b'], cfg['patch_size'])       # (B, NP, D)
    NP = xpe.shape[1]

    # 3) elevation index: bisect_left(per_li, mean(x_g_norm[b]))
    ele_mean = x_g_norm.mean(axis=(1, 2, 3))
    idx = jnp.searchsorted(per_li, ele_mean, side='left')      # == bisect_left
    ele_em = params['eleva_embed'][idx]                        # (Bg, D)

    # crops handling: image c*Bg+b reuses the embeddings of image b
    Bg = x_g_norm.shape[0]
    crops = B // Bg
    ele_em = jnp.tile(ele_em, (crops, 1))
    sift_em = jnp.tile(sift_em, (crops, 1))

    # 4) SAT fusion (Pallas, row-tiled over all B*NP patches)
    x_tok = sat_fuse(xpe, ele_em, sift_em, params['sat'],
                     cfg['sat_h'], cfg['sat_dk'], cfg['sat_dv'])                         # (B, NP, D)

    # 5) cls token + positional embedding, pad sequence to a sublane multiple
    #    (npatch==N and w==h -> no pos-embed interpolation needed)
    N = NP + 1
    Npad = _round_up(N, 8)
    cls_row = jnp.broadcast_to(params['cls_token'] + params['pos_embed'][:, :1], (B, 1, D))
    patch_rows = x_tok + params['pos_embed'][:, 1:N]
    xseq = jnp.concatenate([cls_row, patch_rows], axis=1)                                # (B, N, D)

    TB = B if B <= 16 else 16
    B_pad = _round_up(B, TB)
    xseq = jnp.pad(xseq, ((0, B_pad - B), (0, Npad - N), (0, 0)))                        # (B_pad, Npad, D)

    # 6) transformer blocks (Pallas, one fused kernel per block, TB images/step)
    for bp in params['blocks']:
        xseq = vit_block(xseq, bp, cfg['num_heads'], seq_len=N, tb=TB)

    # 7) final LayerNorm on the CLS rows only (Pallas); return x[:, 0]
    cls = xseq[:B, 0, :]
    return layernorm_rows(cls, params['norm_g'], params['norm_b'])


# ----------------------------------------------------------------------------
if __name__ == "__main__":
    # small, self-consistent configuration
    B, C, H, W = 2, 3, 32, 32
    patch_size = 16
    embed_dim = 192                 # SAT is hard-coded to d_model=192 in the module
    depth = 2
    num_heads = 4
    mlp_ratio = 4.0
    num_ele_slice = 5
    voc_k = 16
    sat_h, sat_dk, sat_dv = 8, 32, 32
    num_patches = (H // patch_size) * (W // patch_size)

    cfg = dict(embed_dim=embed_dim, patch_size=patch_size, num_heads=num_heads,
               sat_h=sat_h, sat_dk=sat_dk, sat_dv=sat_dv)

    key = jax.random.PRNGKey(0)
    kp, kx, kg, ks = jax.random.split(key, 4)

    params = init_params(kp, embed_dim=embed_dim, in_chans=C, patch_size=patch_size,
                         num_patches=num_patches, depth=depth, num_heads=num_heads,
                         mlp_ratio=mlp_ratio, num_ele_slice=num_ele_slice, voc_k=voc_k,
                         sat_h=sat_h, sat_dk=sat_dk, sat_dv=sat_dv)

    x = jax.random.normal(kx, (B, C, H, W), jnp.float32)            # NCHW, like PyTorch
    x_g_norm = jax.random.uniform(kg, (B, 1, H, W), jnp.float32)    # normalized elevation in [0,1)
    sift_bof = jax.random.uniform(ks, (B, voc_k), jnp.float32, 0.0, 10.0)  # synthetic BoF counts
    per_li = jnp.array([0.2, 0.4, 0.6, 0.8, 1.01], jnp.float32)     # elevation slice thresholds

    out = forward(params, x, x_g_norm, sift_bof, per_li, cfg)
    out = jax.block_until_ready(out)
    assert out.shape == (B, embed_dim), out.shape
    assert bool(jnp.all(jnp.isfinite(out)))
    print("KERNEL_OK")
</pallas_src>

<mosaic_0001>
module attributes {stable_mosaic.version = 11 : i64} {
  func.func @_matmul_bias_kernel(%arg0: i32, %arg1: memref<8x16xf32, #tpu.memory_space<vmem>>, %arg2: memref<16x192xf32, #tpu.memory_space<vmem>>, %arg3: memref<1x192xf32, #tpu.memory_space<vmem>>, %arg4: memref<8x192xf32, #tpu.memory_space<vmem>>) attributes {dimension_semantics = [#tpu.dimension_semantics<parallel>], iteration_bounds = array<i64: 1>, scalar_prefetch = 0 : i64, scratch_operands = 0 : i64, tpu.core_type = #tpu.core_type<tc>, window_params = [{transform_indices = @transform_0, window_bounds = array<i64: 8, 16>}, {pipeline_mode = #tpu.pipeline_mode<synchronous>, transform_indices = @transform_1, window_bounds = array<i64: 16, 192>}, {pipeline_mode = #tpu.pipeline_mode<synchronous>, transform_indices = @transform_2, window_bounds = array<i64: 1, 192>}, {transform_indices = @transform_3, window_bounds = array<i64: 8, 192>}]} {
    %c0 = arith.constant 0 : index
    %c0_0 = arith.constant 0 : index
    %0 = vector.load %arg1[%c0, %c0_0] : memref<8x16xf32, #tpu.memory_space<vmem>>, vector<8x16xf32>
    %c0_1 = arith.constant 0 : index
    %c0_2 = arith.constant 0 : index
    %1 = vector.load %arg2[%c0_1, %c0_2] : memref<16x192xf32, #tpu.memory_space<vmem>>, vector<16x192xf32>
    %cst = arith.constant dense<0.000000e+00> : vector<8x192xf32>
    %2 = tpu.matmul %0, %1, %cst {dimension_numbers = #tpu.dot_dimension_numbers<[1], [0], [0], [1], [0, 0, 1, 1], [], []>} : vector<8x16xf32>, vector<16x192xf32>, vector<8x192xf32> -> vector<8x192xf32>
    %c0_3 = arith.constant 0 : index
    %c0_4 = arith.constant 0 : index
    %3 = vector.load %arg3[%c0_3, %c0_4] : memref<1x192xf32, #tpu.memory_space<vmem>>, vector<1x192xf32>
    %4 = vector.broadcast %3 : vector<1x192xf32> to vector<8x192xf32>
    %5 = arith.addf %2, %4 : vector<8x192xf32>
    %c0_5 = arith.constant 0 : index
    %c0_6 = arith.constant 0 : index
    %6 = vector.load %arg4[%c0_5, %c0_6] : memref<8x192xf32, #tpu.memory_space<vmem>>, vector<8x192xf32>
    tpu.vector_store %arg4[%c0_5, %c0_6], %5 {strides = array<i32>} : memref<8x192xf32, #tpu.memory_space<vmem>>, vector<8x192xf32>,
    return
  }
  func.func @transform_0(%arg0: i32) -> (i32, i32) {
    %c0_i32 = arith.constant 0 : i32
    %c0_i32_0 = arith.constant 0 : i32
    return %arg0, %c0_i32 : i32, i32
  }
  func.func @transform_1(%arg0: i32) -> (i32, i32) {
    %c0_i32 = arith.constant 0 : i32
    %c0_i32_0 = arith.constant 0 : i32
    %c0_i32_1 = arith.constant 0 : i32
    return %c0_i32, %c0_i32_0 : i32, i32
  }
  func.func @transform_2(%arg0: i32) -> (i32, i32) {
    %c0_i32 = arith.constant 0 : i32
    %c0_i32_0 = arith.constant 0 : i32
    %c0_i32_1 = arith.constant 0 : i32
    return %c0_i32, %c0_i32_0 : i32, i32
  }
  func.func @transform_3(%arg0: i32) -> (i32, i32) {
    %c0_i32 = arith.constant 0 : i32
    %c0_i32_0 = arith.constant 0 : i32
    return %arg0, %c0_i32 : i32, i32
  }
}

</mosaic_0001>

<llo_original>
// kernel: tpu_custom_call.1
$region0: #{tpu_custom_call.1}
  #allocation0 [shape = 'u32[]', space=smem, size = 0x4, offset = 0x4, fixed_abs, tag = 'smem constant byte address 0x4 - core index']
  #allocation1 [shape = 'u32[144,128]{1,0:T(1,128)}', space=vmem, size = 0x12000, scoped, tag = 'internal scratch']
  %s0 = inlined_call_operand.hbm [shape: f32[8,16], index: 0, kind: input, shape index: {}]
  %s1 = inlined_call_operand.hbm [shape: f32[16,192], index: 1, kind: input, shape index: {}]
  %s2 = inlined_call_operand.vmem [shape: f32[1,192], index: 2, kind: input, shape index: {}]
  %s3 = inlined_call_operand.hbm [shape: f32[8,192], index: 3, kind: output, shape index: {}]
  %s4 = sld [smem:[#allocation0]]
  $region30: #{tpu_custom_call.1} parent=0
    _
  %s6 = ssub.s32 1, %s4
  %s7 = scalar_select 0, %s6, %s4
  $region1: #{tpu_custom_call.1} parent=0
    #allocation2 [shape = 'u8[4096]{0}', space=vmem, size = 0x1000, scoped, tag = 'input window, operand 0, single buffered']
    #allocation3 [shape = 's32[1]{0}', space=sflag, size = 0x4, scoped, tag = 'scoped memory for tpu_custom_call.1']
    #allocation4 [shape = 's32[1]{0}', space=sflag, size = 0x4, scoped, tag = 'scoped memory for tpu_custom_call.1']
    #allocation5 [shape = 'u8[16384]{0}', space=vmem, size = 0x4000, scoped, tag = 'input window, operand 1, single buffered']
    #allocation6 [shape = 's32[1]{0}', space=sflag, size = 0x4, scoped, tag = 'scoped memory for tpu_custom_call.1']
    #allocation7 [shape = 'u8[8192]{0}', space=vmem, size = 0x2000, scoped, tag = 'output window, operand 0, single buffered']
    %8 = vsyncpa [#allocation3], 0
    %9 = vsyncpa [#allocation6], 0
    %10 = vsyncpa [#allocation4], 0
    // Predicated region
    $region2: #{tpu_custom_call.1} parent=1 // pred_check
      _
    $region3: #{tpu_custom_call.1} parent=1 // pred_check_branch
      %12 = sbr.rel (0) target = $region5
    $region4: #{tpu_custom_call.1} parent=1 // pred_region
      %s14 = ssub.s32 128, 128
      %15 = vsyncadd [#allocation3], %s14
      %s17 = sshll.u32 [#allocation2], 4
      %s18 = int_to_ptr.vmem [resolvable:$true] %s17
      %20 = dma.hbm_to_vmem [thread:$0]  %s0, 128, %s18, [#allocation3]
    $region5: #{tpu_custom_call.1} parent=1 // pred_fallthru
      _
    // Predicated region
    $region6: #{tpu_custom_call.1} parent=1 // pred_check
      _
    $region7: #{tpu_custom_call.1} parent=1 // pred_check_branch
      %22 = sbr.rel (0) target = $region9
    $region8: #{tpu_custom_call.1} parent=1 // pred_region
      %s24 = ssub.s32 512, 512
      %25 = vsyncadd [#allocation6], %s24
      %s26 = sshll.u32 [#allocation5], 4
      %s27 = int_to_ptr.vmem [resolvable:$true] %s26
      %32 = dma.hbm_to_vmem [thread:$0]  %s1, 512, %s27, [#allocation6], 256, 256, 16
    $region9: #{tpu_custom_call.1} parent=1 // pred_fallthru
      _
    // Predicated region
    $region10: #{tpu_custom_call.1} parent=1 // pred_check
      _
    $region11: #{tpu_custom_call.1} parent=1 // pred_check_branch
      %34 = sbr.rel (0) target = $region13
    $region12: #{tpu_custom_call.1} parent=1 // pred_region
      _
    $region13: #{tpu_custom_call.1} parent=1 // pred_fallthru
      _
    // Predicated region
    $region14: #{tpu_custom_call.1} parent=1 // pred_check
      _
    $region15: #{tpu_custom_call.1} parent=1 // pred_check_branch
      %36 = sbr.rel (0) target = $region17
    $region16: #{tpu_custom_call.1} parent=1 // pred_region
      %37 = dma.done [#allocation3], 128
    $region17: #{tpu_custom_call.1} parent=1 // pred_fallthru
      _
    // Predicated region
    $region18: #{tpu_custom_call.1} parent=1 // pred_check
      _
    $region19: #{tpu_custom_call.1} parent=1 // pred_check_branch
      %39 = sbr.rel (0) target = $region21
    $region20: #{tpu_custom_call.1} parent=1 // pred_region
      %40 = dma.done [#allocation6], 512
    $region21: #{tpu_custom_call.1} parent=1 // pred_fallthru
      _
    %v41 = vld [vmem:[#allocation2] sm:$0xff]
    %v42 = vld [vmem:[#allocation5] sm:$0xff]
    %v43 = vld [vmem:[#allocation5 + $0x8] sm:$0xff]
    %v44 = vld [vmem:[#allocation5 + $0x10] sm:$0xff]
    %v45 = vld [vmem:[#allocation5 + $0x18] sm:$0xff]
    %v46 = vld [vmem:[%s2] sm:$0x3]
    %v48 = vlaneseq
    %v49 = vshrl.u32 %v48, 7
    %v50 = vsub.s32 0, %v49
    %v51 = vrot.slane %v46, %v50
    %v52 = vlaneseq
    %v53 = vshrl.u32 %v52, 7
    %v54 = vsub.s32 1, %v53
    %v55 = vrot.slane %v46, %v54
    %vm58 = vcmask 130048
    %v60 = vsel %vm58, %v41, 0
    %62 = vmatprep.subr.mxu0 %v43
    %63 = vmatpush1.msra.mxu0 %v42
    %64 = vmatprep.subr.mxu0 %v45
    %65 = vmatpush1.msra.mxu0 %v44
    %66 = vmatprep.subr.mxu0 0.0
    %67 = vmatpush1.msra.mxu0 0.0
    %68 = vmatprep.subr.mxu0 0.0
    %69 = vmatpush1.msra.mxu0 0.0
    %70 = vmatprep.subr.mxu0 0.0
    %71 = vmatpush1.msra.mxu0 0.0
    %72 = vmatprep.subr.mxu0 0.0
    %73 = vmatpush1.msra.mxu0 0.0
    %74 = vmatprep.subr.mxu0 0.0
    %75 = vmatpush1.msra.mxu0 0.0
    %76 = vmatprep.subr.mxu0 0.0
    %77 = vmatpush1.msra.mxu0 0.0
    %78 = vmatprep.subr.mxu0 0.0
    %79 = vmatpush1.msra.mxu0 0.0
    %80 = vmatprep.subr.mxu0 0.0
    %81 = vmatpush1.msra.mxu0 0.0
    %82 = vmatprep.subr.mxu0 0.0
    %83 = vmatpush1.msra.mxu0 0.0
    %84 = vmatprep.subr.mxu0 0.0
    %85 = vmatpush1.msra.mxu0 0.0
    %86 = vmatprep.subr.mxu0 0.0
    %87 = vmatpush1.msra.mxu0 0.0
    %88 = vmatprep.subr.mxu0 0.0
    %89 = vmatpush1.msra.mxu0 0.0
    %90 = vmatprep.subr.mxu0 0.0
    %91 = vmatpush1.msra.mxu0 0.0
    %92 = vmatprep.subr.mxu0 0.0
    %93 = vmatpush1.msra.mxu0 0.0
    %94 = vmatprep.subr.mxu0 0.0
    %95 = vmatpush1.msra.mxu0 0.0
    %96 = vmatprep.subr.mxu0 0.0
    %97 = vmatpush1.msra.mxu0 0.0
    %98 = vmatprep.subr.mxu0 0.0
    %99 = vmatpush1.msra.mxu0 0.0
    %100 = vmatprep.subr.mxu0 0.0
    %101 = vmatpush1.msra.mxu0 0.0
    %102 = vmatprep.subr.mxu0 0.0
    %103 = vmatpush1.msra.mxu0 0.0
    %104 = vmatprep.subr.mxu0 0.0
    %105 = vmatpush1.msra.mxu0 0.0
    %106 = vmatprep.subr.mxu0 0.0
    %107 = vmatpush1.msra.mxu0 0.0
    %108 = vmatprep.subr.mxu0 0.0
    %109 = vmatpush1.msra.mxu0 0.0
    %110 = vmatprep.subr.mxu0 0.0
    %111 = vmatpush1.msra.mxu0 0.0
    %112 = vmatprep.subr.mxu0 0.0
    %113 = vmatpush1.msra.mxu0 0.0
    %114 = vmatprep.subr.mxu0 0.0
    %115 = vmatpush1.msra.mxu0 0.0
    %116 = vmatprep.subr.mxu0 0.0
    %117 = vmatpush1.msra.mxu0 0.0
    %118 = vmatprep.subr.mxu0 0.0
    %119 = vmatpush1.msra.mxu0 0.0
    %120 = vmatprep.subr.mxu0 0.0
    %121 = vmatpush1.msra.mxu0 0.0
    %122 = vmatprep.subr.mxu0 0.0
    %123 = vmatpush1.msra.mxu0 0.0
    %124 = vmatprep.subr.mxu0 0.0
    %125 = vmatpush1.msra.mxu0 0.0
    %126 = vmatprep.mubr.f32.mxu0 0.0
    %127 = vmatmul.mubr.f32.gmra.mrb[0].mxu0 %v60
    %v128 = vpop.f32.mrb[0].mxu0
    %v129 = vadd.f32 %v51, %v128
    %v130 = vpop.f32.mrb[0].mxu0
    %v131 = vadd.f32 %v55, %v130
    %132 = vdwg.mxu0
    %133 = vst [vmem:[#allocation7] sm:$0xff] %v129
    %vm134 = vcmask 523264
    %135 = vst.msk [vmem:[#allocation7 + $0x8] sm:$0xff] %vm134, %v131
    // Predicated region
    $region22: #{tpu_custom_call.1} parent=1 // pred_check
      _
    $region23: #{tpu_custom_call.1} parent=1 // pred_check_branch
      %137 = sbr.rel (0) target = $region25
    $region24: #{tpu_custom_call.1} parent=1 // pred_region
      %s139 = ssub.s32 256, 256
      %140 = vsyncadd [#allocation4], %s139
      %s142 = sshll.u32 [#allocation7], 4
      %s143 = int_to_ptr.vmem [resolvable:$true] %s142
      %145 = dma.vmem_to_hbm [thread:$0]  %s143, 256, %s3, [#allocation4]
    $region25: #{tpu_custom_call.1} parent=1 // pred_fallthru
      _
    // Predicated region
    $region26: #{tpu_custom_call.1} parent=1 // pred_check
      _
    $region27: #{tpu_custom_call.1} parent=1 // pred_check_branch
      %147 = sbr.rel (0) target = $region29
    $region28: #{tpu_custom_call.1} parent=1 // pred_region
      %148 = dma.done [#allocation4], 256
    $region29: #{tpu_custom_call.1} parent=1 // pred_fallthru
      _
    %149 = vsyncpa [#allocation3], 1
    %150 = vsyncpa [#allocation6], 1
    %151 = vsyncpa [#allocation4], 1

</llo_original>
